<compile_context>
chip_gen: v7x
topology: tpu7x:2x2x1
jax: 0.10.0
libtpu: 0.0.40
codegen_flags: <defaults>
</compile_context>

<pallas_src>
import jax
import jax.numpy as jnp
from jax.experimental import pallas as pl
from jax.experimental.pallas import tpu as pltpu


def _conv_gemm_kernel(w_ref, b_ref, p_ref, o_ref):
    # w_ref: (Cout, Kpad)  bf16 flattened conv weights (K zero-padded)
    # b_ref: (Cout, 1)     f32 bias
    # p_ref: (Kpad, M)     bf16 one image's im2col patches, M = Ho*Wo in lanes
    # o_ref: (Cout, M)     f32 output (lane-dense)
    acc = jnp.dot(w_ref[...], p_ref[...], preferred_element_type=jnp.float32)
    o_ref[...] = acc + b_ref[...]


def _im2col_kxm(x, kh, kw):
    # x: (N, C, H, W) -> patches (N, C*kh*kw, Ho*Wo); K ordered (C, kh, kw)
    # so it matches weight.reshape(Cout, C*kh*kw). M = Ho*Wo is the last (lane) dim.
    n, c, h, w = x.shape
    ho, wo = h - kh + 1, w - kw + 1
    cols = []
    for i in range(kh):
        for j in range(kw):
            cols.append(x[:, :, i:i + ho, j:j + wo])          # (N, C, Ho, Wo)
    patches = jnp.stack(cols, axis=2)                          # (N, C, kh*kw, Ho, Wo)
    patches = patches.reshape(n, c * kh * kw, ho * wo)         # (N, K, M)
    return patches, ho, wo


def tudui_forward(x, weight, bias):
    """x: (N, 3, H, W) NCHW float32; weight: (64, 3, 3, 3); bias: (64,)."""
    n = x.shape[0]
    cout, cin, kh, kw = weight.shape

    patches, ho, wo = _im2col_kxm(x, kh, kw)                   # (N, K, M) f32
    k = cin * kh * kw
    m = ho * wo
    k_pad = ((k + 31) // 32) * 32                              # 27 -> 32 aligned K

    # Zero-pad the contraction dim and cast matmul operands to bf16 (f32 accumulate).
    patches = jnp.pad(patches, ((0, 0), (0, k_pad - k), (0, 0))).astype(jnp.bfloat16)
    w_mat = jnp.pad(weight.reshape(cout, k), ((0, 0), (0, k_pad - k))).astype(jnp.bfloat16)
    b_mat = bias.reshape(cout, 1).astype(jnp.float32)          # broadcasts along lanes

    out = pl.pallas_call(
        _conv_gemm_kernel,
        out_shape=jax.ShapeDtypeStruct((n, cout, m), jnp.float32),
        grid_spec=pltpu.PrefetchScalarGridSpec(
            num_scalar_prefetch=0,
            grid=(n,),
            in_specs=[
                pl.BlockSpec((cout, k_pad), lambda b: (0, 0)),              # weights (resident)
                pl.BlockSpec((cout, 1), lambda b: (0, 0)),                  # bias
                pl.BlockSpec((pl.Squeezed(), k_pad, m), lambda b: (b, 0, 0)),  # patches
            ],
            out_specs=pl.BlockSpec((pl.Squeezed(), cout, m), lambda b: (b, 0, 0)),
        ),
        compiler_params=pltpu.CompilerParams(
            dimension_semantics=("parallel",)),
    )(w_mat, b_mat, patches)

    # (N, Cout, Ho*Wo) -> (N, Cout, Ho, Wo): free contiguous reshape, already NCHW.
    return out.reshape(n, cout, ho, wo)


if __name__ == "__main__":
    key = jax.random.PRNGKey(0)
    k_x, k_w, k_b = jax.random.split(key, 3)

    # Conv2d(3, 64, kernel_size=3): weight (64, 3, 3, 3), bias (64,)
    # PyTorch-default-style uniform init, deterministic.
    fan_in = 3 * 3 * 3
    bound = 1.0 / (fan_in ** 0.5)
    weight = jax.random.uniform(k_w, (64, 3, 3, 3), jnp.float32, -bound, bound)
    bias = jax.random.uniform(k_b, (64,), jnp.float32, -bound, bound)

    # Small NCHW input: batch=2, channels=3 (required by conv1), spatial=16
    x = jax.random.normal(k_x, (2, 3, 16, 16), jnp.float32)

    fwd = jax.jit(tudui_forward)
    y = fwd(x, weight, bias)
    y = jax.block_until_ready(y)
    assert y.shape == (2, 64, 14, 14), y.shape

    # Exactness check against XLA conv on the same bf16-rounded operands
    # (kernel multiplies bf16 exactly and accumulates in f32).
    y_ref_bf16 = jax.lax.conv_general_dilated(
        x.astype(jnp.bfloat16).astype(jnp.float32),
        weight.astype(jnp.bfloat16).astype(jnp.float32),
        window_strides=(1, 1), padding="VALID",
        dimension_numbers=("NCHW", "OIHW", "NCHW"),
    ) + bias.reshape(1, 64, 1, 1)
    assert jnp.allclose(y, y_ref_bf16, atol=1e-3, rtol=1e-3)

    # Semantic check against the full-precision conv (tolerance relaxed for bf16 MXU inputs).
    y_ref = jax.lax.conv_general_dilated(
        x, weight, window_strides=(1, 1), padding="VALID",
        dimension_numbers=("NCHW", "OIHW", "NCHW"),
    ) + bias.reshape(1, 64, 1, 1)
    assert jnp.allclose(y, y_ref, atol=5e-2, rtol=5e-2)

    print("KERNEL_OK")
</pallas_src>

<mosaic_0001>
module attributes {stable_mosaic.version = 11 : i64} {
  func.func @_conv_gemm_kernel(%arg0: i32, %arg1: memref<64x32xbf16, #tpu.memory_space<vmem>>, %arg2: memref<64x1xf32, #tpu.memory_space<vmem>>, %arg3: memref<1x32x196xbf16, #tpu.memory_space<vmem>>, %arg4: memref<1x64x196xf32, #tpu.memory_space<vmem>>) attributes {dimension_semantics = [#tpu.dimension_semantics<parallel>], iteration_bounds = array<i64: 2>, scalar_prefetch = 0 : i64, scratch_operands = 0 : i64, tpu.core_type = #tpu.core_type<tc>, window_params = [{pipeline_mode = #tpu.pipeline_mode<synchronous>, transform_indices = @transform_0, window_bounds = array<i64: 64, 32>}, {pipeline_mode = #tpu.pipeline_mode<synchronous>, transform_indices = @transform_1, window_bounds = array<i64: 64, 1>}, {transform_indices = @transform_2, window_bounds = array<i64: 1, 32, 196>}, {transform_indices = @transform_3, window_bounds = array<i64: 1, 64, 196>}]} {
    %c0 = arith.constant 0 : index
    %c0_0 = arith.constant 0 : index
    %0 = vector.load %arg1[%c0, %c0_0] : memref<64x32xbf16, #tpu.memory_space<vmem>>, vector<64x32xbf16>
    %c0_1 = arith.constant 0 : index
    %c0_2 = arith.constant 0 : index
    %c0_3 = arith.constant 0 : index
    %1 = vector.load %arg3[%c0_1, %c0_2, %c0_3] : memref<1x32x196xbf16, #tpu.memory_space<vmem>>, vector<1x32x196xbf16>
    %2 = vector.shape_cast %1 : vector<1x32x196xbf16> to vector<32x196xbf16>
    %cst = arith.constant dense<0.000000e+00> : vector<64x196xf32>
    %3 = tpu.matmul %0, %2, %cst {dimension_numbers = #tpu.dot_dimension_numbers<[1], [0], [0], [1], [0, 0, 1, 1], [], []>} : vector<64x32xbf16>, vector<32x196xbf16>, vector<64x196xf32> -> vector<64x196xf32>
    %c0_4 = arith.constant 0 : index
    %c0_5 = arith.constant 0 : index
    %4 = vector.load %arg2[%c0_4, %c0_5] : memref<64x1xf32, #tpu.memory_space<vmem>>, vector<64x1xf32>
    %5 = vector.broadcast %4 : vector<64x1xf32> to vector<64x196xf32>
    %6 = arith.addf %3, %5 : vector<64x196xf32>
    %c0_6 = arith.constant 0 : index
    %c0_7 = arith.constant 0 : index
    %c0_8 = arith.constant 0 : index
    %7 = vector.load %arg4[%c0_6, %c0_7, %c0_8] : memref<1x64x196xf32, #tpu.memory_space<vmem>>, vector<1x64x196xf32>
    %8 = vector.shape_cast %7 : vector<1x64x196xf32> to vector<64x196xf32>
    %9 = vector.shape_cast %6 : vector<64x196xf32> to vector<1x64x196xf32>
    tpu.vector_store %arg4[%c0_6, %c0_7, %c0_8], %9 {strides = array<i32>} : memref<1x64x196xf32, #tpu.memory_space<vmem>>, vector<1x64x196xf32>,
    return
  }
  func.func @transform_0(%arg0: i32) -> (i32, i32) {
    %c0_i32 = arith.constant 0 : i32
    %c0_i32_0 = arith.constant 0 : i32
    %c0_i32_1 = arith.constant 0 : i32
    return %c0_i32, %c0_i32_0 : i32, i32
  }
  func.func @transform_1(%arg0: i32) -> (i32, i32) {
    %c0_i32 = arith.constant 0 : i32
    %c0_i32_0 = arith.constant 0 : i32
    %c0_i32_1 = arith.constant 0 : i32
    return %c0_i32, %c0_i32_0 : i32, i32
  }
  func.func @transform_2(%arg0: i32) -> (i32, i32, i32) {
    %c0_i32 = arith.constant 0 : i32
    %c0_i32_0 = arith.constant 0 : i32
    %c0_i32_1 = arith.constant 0 : i32
    return %arg0, %c0_i32, %c0_i32_0 : i32, i32, i32
  }
  func.func @transform_3(%arg0: i32) -> (i32, i32, i32) {
    %c0_i32 = arith.constant 0 : i32
    %c0_i32_0 = arith.constant 0 : i32
    %c0_i32_1 = arith.constant 0 : i32
    return %arg0, %c0_i32, %c0_i32_0 : i32, i32, i32
  }
}

</mosaic_0001>

<llo_original>
// kernel: tudui_forward.1
$region0: #{tudui_forward.1}
  #allocation0 [shape = 'u32[]', space=smem, size = 0x4, offset = 0x4, fixed_abs, tag = 'smem constant byte address 0x4 - core index']
  #allocation1 [shape = 'u32[144,128]{1,0:T(1,128)}', space=vmem, size = 0x12000, scoped, tag = 'internal scratch']
  %s0 = inlined_call_operand.vmem [shape: bf16[64,32], index: 0, kind: input, shape index: {}]
  %s1 = inlined_call_operand.vmem [shape: f32[64,1], index: 1, kind: input, shape index: {}]
  %s2 = inlined_call_operand.vmem [shape: bf16[2,32,196], index: 2, kind: input, shape index: {}]
  %s3 = inlined_call_operand.vmem [shape: f32[2,64,196], index: 3, kind: output, shape index: {}]
  %s4 = sld [smem:[#allocation0]]
  $region45: #{tudui_forward.1} parent=0
    _
  %s6 = ssub.s32 1, %s4
  %s7 = scalar_select 0, %s6, %s4
  loop: start=0, step=1, limit=4
  $region2: #{tudui_forward.1} parent=0 // loop_pre_header
    _
  $region3: #{tudui_forward.1} parent=0 // loop_header
    %s9 = sphi 0, %s13
    %p10 = scmp.ge.s32.totalorder %s9, 4
    %s17 = sphi 0, %s17
    %s19 = sphi 0, %s17
    %s20 = sphi 0, %s19
    %s34 = sphi 0, %s20
    %s38 = sphi 0, %s38
    %s40 = sphi 0, %s38
    %s41 = sphi 0, %s40
    %s55 = sphi 0, %s41
    %s61 = sphi 0, %s63
    %s64 = sphi 0, %s61
    %s65 = sphi 0, %s64
    %s81 = sphi 0, %s65
    %s87 = sphi 0, %s89
    %s90 = sphi 0, %s87
    %s91 = sphi 0, %s90
    %s107 = sphi 0, %s91
  $region4: #{tudui_forward.1} parent=0 // loop_header_branch
    %12 = sbr.rel (%p10) target = $region8
  $region5: #{tudui_forward.1} parent=0 // loop_body
    %s14 = ssub.s32 %s9, 1
    %s15 = ssub.s32 %s9, 2
    %s16 = sadd.s32 %s9, 1
    %s18 = sadd.s32 %s17, 1
    %p21 = scmp.eq.s32.totalorder %s9, 1
    %p22 = scmp.ne.s32.totalorder %s17, %s19
    %p23 = scmp.eq.s32.totalorder %s9, 0
    %p24 = por %p22, %p23
    %p25 = scmp.ne.s32.totalorder %s17, %s19
    %p26 = scmp.eq.s32.totalorder %s14, 1
    %p27 = por %p25, %p26
    %p28 = scmp.ne.s32.totalorder %s19, %s20
    %p29 = scmp.eq.s32.totalorder %s14, 0
    %p30 = por %p28, %p29
    %p31 = scmp.ne.s32.totalorder %s19, %s20
    %p32 = scmp.eq.s32.totalorder %s15, 1
    %p33 = por %p31, %p32
    %p35 = scmp.ne.s32.totalorder %s20, %s34
    %p36 = scmp.eq.s32.totalorder %s15, 0
    %p37 = por %p35, %p36
    %s39 = sadd.s32 %s38, 1
    %p42 = scmp.eq.s32.totalorder %s9, 1
    %p43 = scmp.ne.s32.totalorder %s38, %s40
    %p44 = scmp.eq.s32.totalorder %s9, 0
    %p45 = por %p43, %p44
    %p46 = scmp.ne.s32.totalorder %s38, %s40
    %p47 = scmp.eq.s32.totalorder %s14, 1
    %p48 = por %p46, %p47
    %p49 = scmp.ne.s32.totalorder %s40, %s41
    %p50 = scmp.eq.s32.totalorder %s14, 0
    %p51 = por %p49, %p50
    %p52 = scmp.ne.s32.totalorder %s40, %s41
    %p53 = scmp.eq.s32.totalorder %s15, 1
    %p54 = por %p52, %p53
    %p56 = scmp.ne.s32.totalorder %s41, %s55
    %p57 = scmp.eq.s32.totalorder %s15, 0
    %p58 = por %p56, %p57
    %s59 = ssub.s32 %s9, %s16
    %p60 = scmp.eq.s32.totalorder %s59, 0
    %s62 = sadd.s32 %s61, 1
    %s63 = scalar_select %p60, %s61, %s62
    %p66 = pneg %p60
    %p67 = scmp.eq.s32.totalorder %s9, 1
    %p68 = por %p66, %p67
    %p69 = scmp.ne.s32.totalorder %s61, %s64
    %p70 = scmp.eq.s32.totalorder %s9, 0
    %p71 = por %p69, %p70
    %p72 = scmp.ne.s32.totalorder %s61, %s64
    %p73 = scmp.eq.s32.totalorder %s14, 1
    %p74 = por %p72, %p73
    %p75 = scmp.ne.s32.totalorder %s64, %s65
    %p76 = scmp.eq.s32.totalorder %s14, 0
    %p77 = por %p75, %p76
    %p78 = scmp.ne.s32.totalorder %s64, %s65
    %p79 = scmp.eq.s32.totalorder %s15, 1
    %p80 = por %p78, %p79
    %p82 = scmp.ne.s32.totalorder %s65, %s81
    %p83 = scmp.eq.s32.totalorder %s15, 0
    %p84 = por %p82, %p83
    %s85 = ssub.s32 %s9, %s16
    %p86 = scmp.eq.s32.totalorder %s85, 0
    %s88 = sadd.s32 %s87, 1
    %s89 = scalar_select %p86, %s87, %s88
    %p92 = pneg %p86
    %p93 = scmp.eq.s32.totalorder %s9, 1
    %p94 = por %p92, %p93
    %p95 = scmp.ne.s32.totalorder %s87, %s90
    %p96 = scmp.eq.s32.totalorder %s9, 0
    %p97 = por %p95, %p96
    %p98 = scmp.ne.s32.totalorder %s87, %s90
    %p99 = scmp.eq.s32.totalorder %s14, 1
    %p100 = por %p98, %p99
    %p101 = scmp.ne.s32.totalorder %s90, %s91
    %p102 = scmp.eq.s32.totalorder %s14, 0
    %p103 = por %p101, %p102
    %p104 = scmp.ne.s32.totalorder %s90, %s91
    %p105 = scmp.eq.s32.totalorder %s15, 1
    %p106 = por %p104, %p105
    %p108 = scmp.ne.s32.totalorder %s91, %s107
    %p109 = scmp.eq.s32.totalorder %s15, 0
    %p110 = por %p108, %p109
    %p111 = scmp.le.s32.totalorder 1, %s9
    %p112 = scmp.lt.s32.totalorder %s9, 3
    %p113 = pnand %p111, %p112
    %p114 = pneg %p113
    // Predicated region
    $region9: #{tudui_forward.1} parent=5 // pred_check
      _
    $region10: #{tudui_forward.1} parent=5 // pred_check_branch
      %116 = sbr.rel (%p113) target = $region12
    $region11: #{tudui_forward.1} parent=5 // pred_region
      %s117 = ssub.s32 %s9, 1
      // Predicated region
      $region13: #{tudui_forward.1} parent=11 // pred_check
        %p118 = pneg %p30
      $region14: #{tudui_forward.1} parent=11 // pred_check_branch
        %120 = sbr.rel (%p118) target = $region16
      $region15: #{tudui_forward.1} parent=11 // pred_region
        _
      $region16: #{tudui_forward.1} parent=11 // pred_fallthru
        _
      // Predicated region
      $region17: #{tudui_forward.1} parent=11 // pred_check
        %p121 = pneg %p51
      $region18: #{tudui_forward.1} parent=11 // pred_check_branch
        %123 = sbr.rel (%p121) target = $region20
      $region19: #{tudui_forward.1} parent=11 // pred_region
        _
      $region20: #{tudui_forward.1} parent=11 // pred_fallthru
        _
    $region12: #{tudui_forward.1} parent=5 // pred_fallthru
      _
    %p124 = scmp.lt.s32.totalorder %s9, 2
    // Predicated region
    $region21: #{tudui_forward.1} parent=5 // pred_check
      %p125 = pneg %p124
    $region22: #{tudui_forward.1} parent=5 // pred_check_branch
      %127 = sbr.rel (%p125) target = $region24
    $region23: #{tudui_forward.1} parent=5 // pred_region
      // Predicated region
      $region25: #{tudui_forward.1} parent=23 // pred_check
        %p128 = pneg %p71
      $region26: #{tudui_forward.1} parent=23 // pred_check_branch
        %130 = sbr.rel (%p128) target = $region28
      $region27: #{tudui_forward.1} parent=23 // pred_region
        %p131 = scmp.lt.s32.totalorder %s9, 1
        %s132 = scalar_select %p131, %s9, 1
        %s133 = smul.addr %s132, 8
        %s134 = smul.addr %s133, 4
        %s135 = scalar_lea.vmem %s2, %s134
      $region28: #{tudui_forward.1} parent=23 // pred_fallthru
        _
    $region24: #{tudui_forward.1} parent=5 // pred_fallthru
      _
    %p136 = scmp.le.s32.totalorder 1, %s9
    %p137 = scmp.lt.s32.totalorder %s9, 3
    %p138 = pnand %p136, %p137
    %p139 = pneg %p138
    // Predicated region
    $region29: #{tudui_forward.1} parent=5 // pred_check
      _
    $region30: #{tudui_forward.1} parent=5 // pred_check_branch
      %141 = sbr.rel (%p138) target = $region32
    $region31: #{tudui_forward.1} parent=5 // pred_region
      %s142 = ssub.s32 %s9, 1
      %p143 = pneg %p30
      %p144 = pneg %p27
      %p145 = pneg %p51
      %p146 = pneg %p48
      %p147 = scmp.lt.s32.totalorder %s14, 1
      %s148 = scalar_select %p147, %s14, 1
      %s149 = smul.addr %s148, 8
      %s150 = smul.addr %s149, 4
      %s151 = scalar_lea.vmem %s2, %s150
      %p152 = pneg %p77
      %p153 = pneg %p74
      %p154 = pneg %p103
      %p155 = pneg %p100
      %p156 = scmp.lt.s32.totalorder %s14, 1
      %s157 = scalar_select %p156, %s14, 1
      %s158 = smul.addr %s157, 16
      %s159 = smul.addr %s158, 8
      %s160 = scalar_lea.vmem %s3, %s159
      %p161 = scmp.lt.s32.totalorder %s14, 1
      %s162 = scalar_select %p161, %s14, 1
      %s163 = smul.addr %s162, 8
      %s164 = smul.addr %s163, 4
      %s165 = scalar_lea.vmem %s2, %s164
      %p166 = scmp.lt.s32.totalorder %s14, 1
      %s167 = scalar_select %p166, %s14, 1
      %s168 = smul.addr %s167, 16
      %s169 = smul.addr %s168, 8
      %s170 = scalar_lea.vmem %s3, %s169
      %v172 = vld [vmem:[%s0] sm:$0xf]
      %v173 = vld [vmem:[%s0 + $0x4] sm:$0xf]
      %v174 = vld [vmem:[%s0 + $0x8] sm:$0xf]
      %v175 = vld [vmem:[%s0 + $0xc] sm:$0xf]
      %v176 = vld [vmem:[%s0 + $0x10] sm:$0xf]
      %v177 = vld [vmem:[%s0 + $0x14] sm:$0xf]
      %v178 = vld [vmem:[%s0 + $0x18] sm:$0xf]
      %v179 = vld [vmem:[%s0 + $0x1c] sm:$0xf]
      %v180 = vld [vmem:[%s165] sm:$0xff]
      %v181 = vld [vmem:[%s165 + $0x8] sm:$0xff]
      %v182 = vld [vmem:[%s165 + $0x10] sm:$0xff]
      %v183 = vld [vmem:[%s165 + $0x18] sm:$0xff]
      %v184 = vld [vmem:[%s1] sm:$0xff]
      %v185 = vld [vmem:[%s1 + $0x8] sm:$0xff]
      %v186 = vld [vmem:[%s1 + $0x10] sm:$0xff]
      %v187 = vld [vmem:[%s1 + $0x18] sm:$0xff]
      %v188 = vld [vmem:[%s1 + $0x20] sm:$0xff]
      %v189 = vld [vmem:[%s1 + $0x28] sm:$0xff]
      %v190 = vld [vmem:[%s1 + $0x30] sm:$0xff]
      %v191 = vld [vmem:[%s1 + $0x38] sm:$0xff]
      %193 = vset.pattern.permute.xlu0 0
      %194 = vperm.xlu0 %193, %v184
      %v195 = vpop.permute.xlu0 %194
      %198 = vset.pattern.permute.xlu0 0
      %199 = vperm.xlu0 %198, %v185
      %v200 = vpop.permute.xlu0 %199
      %203 = vset.pattern.permute.xlu0 0
      %204 = vperm.xlu0 %203, %v186
      %v205 = vpop.permute.xlu0 %204
      %208 = vset.pattern.permute.xlu0 0
      %209 = vperm.xlu0 %208, %v187
      %v210 = vpop.permute.xlu0 %209
      %213 = vset.pattern.permute.xlu0 0
      %214 = vperm.xlu0 %213, %v188
      %v215 = vpop.permute.xlu0 %214
      %218 = vset.pattern.permute.xlu0 0
      %219 = vperm.xlu0 %218, %v189
      %v220 = vpop.permute.xlu0 %219
      %223 = vset.pattern.permute.xlu0 0
      %224 = vperm.xlu0 %223, %v190
      %v225 = vpop.permute.xlu0 %224
      %228 = vset.pattern.permute.xlu0 0
      %229 = vperm.xlu0 %228, %v191
      %v230 = vpop.permute.xlu0 %229
      %v240 = vunpack.c.l.b16 %v172
      %v241 = vunpack.c.l.b16 %v173
      %v242 = vunpack.c.l.b16 %v174
      %v243 = vunpack.c.l.b16 %v175
      %v244 = vunpack.c.l.b16 %v176
      %v245 = vunpack.c.l.b16 %v177
      %v246 = vunpack.c.l.b16 %v178
      %v247 = vunpack.c.l.b16 %v179
      %v248 = vpack.c.b16 %v241, %v240
      %v249 = vpack.c.b16 %v243, %v242
      %v250 = vpack.c.b16 %v245, %v244
      %v251 = vpack.c.b16 %v247, %v246
      %v256 = vunpack.c.l.b16 %v180
      %v257 = vunpack.c.h.b16 %v180
      %v258 = vunpack.c.l.b16 %v181
      %v259 = vunpack.c.h.b16 %v181
      %v260 = vunpack.c.l.b16 %v182
      %v261 = vunpack.c.h.b16 %v182
      %v262 = vunpack.c.l.b16 %v183
      %v263 = vunpack.c.h.b16 %v183
      %v264 = vpack.c.b16 %v258, %v256
      %v265 = vpack.c.b16 %v259, %v257
      %v266 = vpack.c.b16 %v262, %v260
      %v267 = vpack.c.b16 %v263, %v261
      %vm272 = vcmask 261120
      %v274 = vsel %vm272, %v248, 0
      %v277 = vsel %vm272, %v249, 0
      %v280 = vsel %vm272, %v250, 0
      %v283 = vsel %vm272, %v251, 0
      %285 = vmatprep.subr.bf16.mxu0 %v265
      %286 = vmatpush1.bf16.msra.mxu0 %v264
      %287 = vmatprep.subr.bf16.mxu0 %v267
      %288 = vmatpush1.bf16.msra.mxu0 %v266
      %289 = vmatprep.subr.bf16.mxu0 0
      %290 = vmatpush1.bf16.msra.mxu0 0
      %291 = vmatprep.subr.bf16.mxu0 0
      %292 = vmatpush1.bf16.msra.mxu0 0
      %293 = vmatprep.subr.bf16.mxu0 0
      %294 = vmatpush1.bf16.msra.mxu0 0
      %295 = vmatprep.subr.bf16.mxu0 0
      %296 = vmatpush1.bf16.msra.mxu0 0
      %297 = vmatprep.subr.bf16.mxu0 0
      %298 = vmatpush1.bf16.msra.mxu0 0
      %299 = vmatprep.subr.bf16.mxu0 0
      %300 = vmatpush1.bf16.msra.mxu0 0
      %301 = vmatprep.subr.bf16.mxu0 0
      %302 = vmatpush1.bf16.msra.mxu0 0
      %303 = vmatprep.subr.bf16.mxu0 0
      %304 = vmatpush1.bf16.msra.mxu0 0
      %305 = vmatprep.subr.bf16.mxu0 0
      %306 = vmatpush1.bf16.msra.mxu0 0
      %307 = vmatprep.subr.bf16.mxu0 0
      %308 = vmatpush1.bf16.msra.mxu0 0
      %309 = vmatprep.subr.bf16.mxu0 0
      %310 = vmatpush1.bf16.msra.mxu0 0
      %311 = vmatprep.subr.bf16.mxu0 0
      %312 = vmatpush1.bf16.msra.mxu0 0
      %313 = vmatprep.subr.bf16.mxu0 0
      %314 = vmatpush1.bf16.msra.mxu0 0
      %315 = vmatprep.subr.bf16.mxu0 0
      %316 = vmatpush1.bf16.msra.mxu0 0
      %317 = vmatprep.mubr.bf16.mxu0 0
      %318 = vmatmul.mubr.bf16.gmra.mrb[0].mxu0 %v274
      %v319 = vpop.f32.mrb[0].mxu0
      %v320 = vadd.f32 %v195, %v319
      %v321 = vpop.f32.mrb[0].mxu0
      %v322 = vadd.f32 %v195, %v321
      %v323 = vpop.f32.mrb[0].mxu0
      %v324 = vadd.f32 %v200, %v323
      %v325 = vpop.f32.mrb[0].mxu0
      %v326 = vadd.f32 %v200, %v325
      %327 = vmatprep.mubr.bf16.mxu0 0
      %328 = vmatmul.mubr.bf16.gmra.mrb[0].mxu0 %v277
      %v329 = vpop.f32.mrb[0].mxu0
      %v330 = vadd.f32 %v205, %v329
      %v331 = vpop.f32.mrb[0].mxu0
      %v332 = vadd.f32 %v205, %v331
      %v333 = vpop.f32.mrb[0].mxu0
      %v334 = vadd.f32 %v210, %v333
      %v335 = vpop.f32.mrb[0].mxu0
      %v336 = vadd.f32 %v210, %v335
      %337 = vmatprep.mubr.bf16.mxu0 0
      %338 = vmatmul.mubr.bf16.gmra.mrb[0].mxu0 %v280
      %v339 = vpop.f32.mrb[0].mxu0
      %v340 = vadd.f32 %v215, %v339
      %v341 = vpop.f32.mrb[0].mxu0
      %v342 = vadd.f32 %v215, %v341
      %v343 = vpop.f32.mrb[0].mxu0
      %v344 = vadd.f32 %v220, %v343
      %v345 = vpop.f32.mrb[0].mxu0
      %v346 = vadd.f32 %v220, %v345
      %347 = vmatprep.mubr.bf16.mxu0 0
      %348 = vmatmul.mubr.bf16.gmra.mrb[0].mxu0 %v283
      %v349 = vpop.f32.mrb[0].mxu0
      %v350 = vadd.f32 %v225, %v349
      %v351 = vpop.f32.mrb[0].mxu0
      %v352 = vadd.f32 %v225, %v351
      %v353 = vpop.f32.mrb[0].mxu0
      %v354 = vadd.f32 %v230, %v353
      %v355 = vpop.f32.mrb[0].mxu0
      %v356 = vadd.f32 %v230, %v355
      %357 = vdwg.mxu0
      %358 = vst [vmem:[%s170] sm:$0xff] %v320
      %vm359 = vcmask 556032
      %360 = vst.msk [vmem:[%s170 + $0x8] sm:$0xff] %vm359, %v322
      %361 = vst [vmem:[%s170 + $0x10] sm:$0xff] %v324
      %362 = vst.msk [vmem:[%s170 + $0x18] sm:$0xff] %vm359, %v326
      %363 = vst [vmem:[%s170 + $0x20] sm:$0xff] %v330
      %364 = vst.msk [vmem:[%s170 + $0x28] sm:$0xff] %vm359, %v332
      %365 = vst [vmem:[%s170 + $0x30] sm:$0xff] %v334
      %366 = vst.msk [vmem:[%s170 + $0x38] sm:$0xff] %vm359, %v336
      %367 = vst [vmem:[%s170 + $0x40] sm:$0xff] %v340
      %368 = vst.msk [vmem:[%s170 + $0x48] sm:$0xff] %vm359, %v342
      %369 = vst [vmem:[%s170 + $0x50] sm:$0xff] %v344
      %370 = vst.msk [vmem:[%s170 + $0x58] sm:$0xff] %vm359, %v346
      %371 = vst [vmem:[%s170 + $0x60] sm:$0xff] %v350
      %372 = vst.msk [vmem:[%s170 + $0x68] sm:$0xff] %vm359, %v352
      %373 = vst [vmem:[%s170 + $0x70] sm:$0xff] %v354
      %374 = vst.msk [vmem:[%s170 + $0x78] sm:$0xff] %vm359, %v356
      %p375 = scmp.lt.s32.totalorder %s14, 1
      %s376 = scalar_select %p375, %s14, 1
      %s377 = smul.addr %s376, 16
      %s378 = smul.addr %s377, 8
      %s379 = scalar_lea.vmem %s3, %s378
      // Predicated region
      $region33: #{tudui_forward.1} parent=31 // pred_check
        %p380 = pneg %p100
      $region34: #{tudui_forward.1} parent=31 // pred_check_branch
        %382 = sbr.rel (%p380) target = $region36
      $region35: #{tudui_forward.1} parent=31 // pred_region
        _
      $region36: #{tudui_forward.1} parent=31 // pred_fallthru
        _
    $region32: #{tudui_forward.1} parent=5 // pred_fallthru
      _
    %p383 = scmp.le.s32.totalorder 2, %s9
    // Predicated region
    $region37: #{tudui_forward.1} parent=5 // pred_check
      %p384 = pneg %p383
    $region38: #{tudui_forward.1} parent=5 // pred_check_branch
      %386 = sbr.rel (%p384) target = $region40
    $region39: #{tudui_forward.1} parent=5 // pred_region
      %s387 = ssub.s32 %s9, 2
      // Predicated region
      $region41: #{tudui_forward.1} parent=39 // pred_check
        %p388 = pneg %p106
      $region42: #{tudui_forward.1} parent=39 // pred_check_branch
        %390 = sbr.rel (%p388) target = $region44
      $region43: #{tudui_forward.1} parent=39 // pred_region
        %p391 = scmp.lt.s32.totalorder %s15, 1
        %s392 = scalar_select %p391, %s15, 1
        %s393 = smul.addr %s392, 16
        %s394 = smul.addr %s393, 8
        %s395 = scalar_lea.vmem %s3, %s394
      $region44: #{tudui_forward.1} parent=39 // pred_fallthru
        _
    $region40: #{tudui_forward.1} parent=5 // pred_fallthru
      _
  $region6: #{tudui_forward.1} parent=0 // loop_footer
    %s13 = sadd.s32 1, %s9
  $region7: #{tudui_forward.1} parent=0 // loop_footer_branch
    %8 = sbr.rel target = $region3
  $region8: #{tudui_forward.1} parent=0 // loop_exit
    _

</llo_original>
